<compile_context>
chip_gen: v6e
topology: v6e:2x2x1
jax: 0.10.0
libtpu: 0.0.40
codegen_flags: <defaults>
</compile_context>

<pallas_src>
import functools

import numpy as np

import jax
import jax.numpy as jnp
from jax import lax
from jax.experimental import pallas as pl
from jax.experimental.pallas import tpu as pltpu


# ------------------------------ Pallas kernel -------------------------------

def _unet_inner_fused_kernel(a_ref, wd_ref, wm_ref, msk_ref, g_ref, b_ref,
                             z_ref, *, wo, eps):
    """down Conv4x4s2 (matmul) -> ReLU -> phase-decomposed ConvT4x4s2 -> BN."""
    n_phase = 4
    m_cols = a_ref.shape[-1]                     # M = N * Ho * Wo (lane axis)
    outer = g_ref.shape[0]

    # ---- down path: LeakyReLU already folded into A; Conv2d k4 s2 p1 as one
    # channels-major, lane-dense matmul (inner, Cin*16) @ (Cin*16, M).
    y = jnp.dot(wd_ref[...], a_ref[...], preferred_element_type=jnp.float32)
    # up-path ReLU applied once, in f32 (cast to bf16 happens at the MXU only).
    y = jnp.maximum(y, 0.0)                                     # (inner, M) f32

    # ---- up path: ConvTranspose2d k4 s2 p1 via sub-pixel phase decomposition.
    # tap_(dh,dw)[ci, i] = y[ci, i + dh*Wo + dw] inside the same image, 0 at
    # the borders: an XLU lane-rotate of y times a per-column 0/1 mask.
    # z accumulates tap-by-tap on the MXU with an f32 accumulator (MRB-friendly
    # on v7x); any wrap-around of the rotate lands only on masked columns.
    z = jnp.zeros((n_phase * outer, m_cols), jnp.float32)
    shifts = [(dh, dw) for dh in (-1, 0, 1) for dw in (-1, 0, 1)]
    for t, (dh, dw) in enumerate(shifts):
        d = dh * wo + dw                         # column shift inside an image
        tap = pltpu.roll(y, (-d) % m_cols, axis=1) if d != 0 else y
        tap = tap * msk_ref[t]                   # (1, M) border-validity mask
        z = z + jnp.dot(wm_ref[t], tap.astype(jnp.bfloat16),
                        preferred_element_type=jnp.float32)

    # ---- BatchNorm2d (training batch statistics) directly in (channel, col).
    # Channel c lives at rows {p*outer + c : p in 0..3} of z.
    cnt = float(n_phase * m_cols)                # = N * H * W per channel
    zp = [z[p * outer:(p + 1) * outer, :] for p in range(n_phase)]
    tot = zp[0]
    for q in zp[1:]:
        tot = tot + q
    mean = jnp.sum(tot, axis=1, keepdims=True) / cnt            # (outer, 1)
    dp = [q - mean for q in zp]
    ssq = dp[0] * dp[0]
    for q in dp[1:]:
        ssq = ssq + q * q
    var = jnp.sum(ssq, axis=1, keepdims=True) / cnt             # (outer, 1)
    scale = lax.rsqrt(var + eps) * g_ref[...]
    shift = b_ref[...]
    # Single lane-dense, full-tile (4*outer, M) store.
    z_ref[...] = jnp.concatenate([q * scale + shift for q in dp], axis=0)


# --------------------- one-time parameter preparation ------------------------

def prepare_unet_params(params):
    """Weight-only transforms, run once at parameter-load time (not per call)."""
    w_down = params["w_down"]              # (inner, Cin, 4, 4)    Conv2d, no bias
    w_up = params["w_up"]                  # (inner, outer, 4, 4)  ConvT2d, no bias
    inner, cin = w_down.shape[0], w_down.shape[1]
    outer = w_up.shape[1]

    # Down conv as a (inner, Cin*16) matmul against the im2col'd input.
    wd_mat = w_down.reshape(inner, cin * 16).astype(jnp.bfloat16)

    # Phase-decomposed ConvTranspose2d weights, packed per input shift:
    #   wm[t, (ph*2+pw)*outer + co, ci] = w_up[ci, co, kh, kw]
    # where t enumerates (dh, dw) in {-1,0,1}^2 and kh = -2*dh + ph + 1,
    # kw = -2*dw + pw + 1 (zero block when kh/kw falls outside [0, 4)).
    kh_of = ({0: 1, -1: 3},        # ph == 0
             {1: 0, 0: 2})         # ph == 1
    w_up_np = np.asarray(w_up, np.float32)
    wm = np.zeros((9, 4 * outer, inner), np.float32)
    shifts = [(dh, dw) for dh in (-1, 0, 1) for dw in (-1, 0, 1)]
    for t, (dh, dw) in enumerate(shifts):
        for ph in (0, 1):
            kh = kh_of[ph].get(dh)
            if kh is None:
                continue
            for pw in (0, 1):
                kw = kh_of[pw].get(dw)
                if kw is None:
                    continue
                r0 = (ph * 2 + pw) * outer
                wm[t, r0:r0 + outer, :] = w_up_np[:, :, kh, kw].T
    return dict(
        wd_mat=wd_mat,
        wm_mat=jnp.asarray(wm, jnp.bfloat16),
        gamma=params["gamma"].astype(jnp.float32).reshape(outer, 1),
        beta=params["beta"].astype(jnp.float32).reshape(outer, 1),
    )


# -------------------------------- forward ------------------------------------

def unet_innermost_forward(x, prep):
    """UnetSkipConnectionBlock(innermost=True, norm_layer=BatchNorm2d) forward."""
    N, Cin, H, W = x.shape
    wd_mat, wm_mat = prep["wd_mat"], prep["wm_mat"]
    gamma, beta = prep["gamma"], prep["beta"]
    inner = wd_mat.shape[0]
    outer = gamma.shape[0]
    Ho, Wo = H // 2, W // 2
    M = N * Ho * Wo

    # ---- input-side glue (one XLA fusion): LeakyReLU on the SOURCE once, then
    # channels-major transposed im2col A[(ci,kh,kw), (n,ho,wo)], bf16.
    # TODO(synk): at production sizes move this im2col in-kernel (padded
    # channels-major block + in-kernel strided taps) to drop the HBM round trip.
    xa = jnp.where(x > 0, x, 0.2 * x)
    xp = jnp.pad(xa, ((0, 0), (0, 0), (1, 1), (1, 1)))
    taps = [xp[:, :, kh:kh + 2 * Ho:2, kw:kw + 2 * Wo:2]
            for kh in range(4) for kw in range(4)]
    a_mat = jnp.stack(taps, axis=2)                              # (N,Cin,16,Ho,Wo)
    a_mat = a_mat.transpose(1, 2, 0, 3, 4).reshape(Cin * 16, M)
    a_mat = a_mat.astype(jnp.bfloat16)

    # ---- per-column border-validity masks for the 9 ConvT taps (numpy on
    # static shapes -> compile-time constant, no per-call device work, 4.5 KiB).
    idx = np.arange(M)
    mrow = (idx // Wo) % Ho
    lcol = idx % Wo
    masks_np = np.zeros((9, 1, M), np.float32)
    shifts = [(dh, dw) for dh in (-1, 0, 1) for dw in (-1, 0, 1)]
    for t, (dh, dw) in enumerate(shifts):
        masks_np[t, 0, :] = ((mrow + dh >= 0) & (mrow + dh < Ho) &
                             (lcol + dw >= 0) & (lcol + dw < Wo))
    masks = jnp.asarray(masks_np)

    kernel = functools.partial(_unet_inner_fused_kernel, wo=Wo, eps=1e-5)

    flops = 2 * M * (inner * Cin * 16 + 9 * 4 * outer * inner)
    bytes_accessed = (2 * (a_mat.size + wd_mat.size + wm_mat.size)
                      + 4 * (masks.size + gamma.size + beta.size + 4 * outer * M))

    z = pl.pallas_call(
        kernel,
        out_shape=jax.ShapeDtypeStruct((4 * outer, M), jnp.float32),
        grid=(1,),
        in_specs=[
            pl.BlockSpec((Cin * 16, M), lambda i: (0, 0)),
            pl.BlockSpec((inner, Cin * 16), lambda i: (0, 0)),
            pl.BlockSpec((9, 4 * outer, inner), lambda i: (0, 0, 0)),
            pl.BlockSpec((9, 1, M), lambda i: (0, 0, 0)),
            # gamma / beta: tiny (outer, 1) VMEM loads (one-off, negligible).
            pl.BlockSpec((outer, 1), lambda i: (0, 0)),
            pl.BlockSpec((outer, 1), lambda i: (0, 0)),
        ],
        out_specs=pl.BlockSpec((4 * outer, M), lambda i: (0, 0)),
        compiler_params=pltpu.CompilerParams(dimension_semantics=("arbitrary",)),
        cost_estimate=pl.CostEstimate(flops=flops, transcendentals=outer,
                                      bytes_accessed=bytes_accessed),
    )(a_mat, wd_mat, wm_mat, masks, gamma, beta)

    # ---- output-side glue (one XLA fusion): pixel-shuffle the 4 phases back
    # to NCHW and attach the skip connection.
    z = z.reshape(2, 2, outer, N, Ho, Wo).transpose(3, 2, 4, 0, 5, 1)
    z = z.reshape(N, outer, H, W)
    return jnp.concatenate([x, z], axis=1)


# ---------------------------- pure-JAX reference -----------------------------

def reference(x, params):
    w_down, w_up = params["w_down"], params["w_up"]
    gamma, beta = params["gamma"], params["beta"]
    h = jnp.where(x > 0, x, 0.2 * x)
    h = lax.conv_general_dilated(h, w_down, window_strides=(2, 2),
                                 padding=[(1, 1), (1, 1)],
                                 dimension_numbers=("NCHW", "OIHW", "NCHW"))
    h = jnp.maximum(h, 0.0)
    w_fwd = jnp.flip(w_up, axis=(2, 3)).transpose(1, 0, 2, 3)
    h = lax.conv_general_dilated(h, w_fwd, window_strides=(1, 1),
                                 padding=[(2, 2), (2, 2)], lhs_dilation=(2, 2),
                                 dimension_numbers=("NCHW", "OIHW", "NCHW"))
    mean = h.mean(axis=(0, 2, 3), keepdims=True)
    var = ((h - mean) ** 2).mean(axis=(0, 2, 3), keepdims=True)
    h = (h - mean) * lax.rsqrt(var + 1e-5) * gamma.reshape(1, -1, 1, 1) \
        + beta.reshape(1, -1, 1, 1)
    return jnp.concatenate([x, h], axis=1)


# ----------------------------------- main ------------------------------------

if __name__ == "__main__":
    key = jax.random.PRNGKey(0)
    k_x, k_wd, k_wu = jax.random.split(key, 3)

    outer_layers, inner_layers = 4, 8          # input_layers defaults to outer_layers
    N, H, W = 2, 16, 16
    x = jax.random.normal(k_x, (N, outer_layers, H, W), jnp.float32)

    params = dict(
        # Conv2d(input=4, inner=8, k=4, s=2, p=1), bias=False (BatchNorm2d norm)
        w_down=0.02 * jax.random.normal(k_wd, (inner_layers, outer_layers, 4, 4), jnp.float32),
        # ConvTranspose2d(inner=8, outer=4, k=4, s=2, p=1), bias=False
        w_up=0.02 * jax.random.normal(k_wu, (inner_layers, outer_layers, 4, 4), jnp.float32),
        # BatchNorm2d(outer) default affine init
        gamma=jnp.ones((outer_layers,), jnp.float32),
        beta=jnp.zeros((outer_layers,), jnp.float32),
    )

    prep = prepare_unet_params(params)          # weight-only transforms, once
    fwd = jax.jit(unet_innermost_forward)

    out = jax.block_until_ready(fwd(x, prep))

    ref = reference(x, params)
    assert out.shape == (N, 2 * outer_layers, H, W), out.shape
    max_err = float(jnp.max(jnp.abs(out - ref)))
    # bf16 MXU operands with f32 accumulation; y kept in f32 through the tap
    # path, so tolerance is tighter than the previous shift-matrix version.
    assert jnp.allclose(out, ref, atol=4e-2, rtol=4e-2), max_err

    print("KERNEL_OK")
</pallas_src>

<mosaic_0001>
module attributes {stable_mosaic.version = 11 : i64} {
  func.func @_unet_inner_fused_kernel(%arg0: i32, %arg1: memref<64x128xbf16, #tpu.memory_space<vmem>>, %arg2: memref<8x64xbf16, #tpu.memory_space<vmem>>, %arg3: memref<9x16x8xbf16, #tpu.memory_space<vmem>>, %arg4: memref<9x1x128xf32, #tpu.memory_space<vmem>>, %arg5: memref<4x1xf32, #tpu.memory_space<vmem>>, %arg6: memref<4x1xf32, #tpu.memory_space<vmem>>, %arg7: memref<16x128xf32, #tpu.memory_space<vmem>>) attributes {dimension_semantics = [#tpu.dimension_semantics<arbitrary>], iteration_bounds = array<i64: 1>, scalar_prefetch = 0 : i64, scratch_operands = 0 : i64, tpu.core_type = #tpu.core_type<tc>, window_params = [{pipeline_mode = #tpu.pipeline_mode<synchronous>, transform_indices = @transform_0, window_bounds = array<i64: 64, 128>}, {pipeline_mode = #tpu.pipeline_mode<synchronous>, transform_indices = @transform_1, window_bounds = array<i64: 8, 64>}, {pipeline_mode = #tpu.pipeline_mode<synchronous>, transform_indices = @transform_2, window_bounds = array<i64: 9, 16, 8>}, {pipeline_mode = #tpu.pipeline_mode<synchronous>, transform_indices = @transform_3, window_bounds = array<i64: 9, 1, 128>}, {pipeline_mode = #tpu.pipeline_mode<synchronous>, transform_indices = @transform_4, window_bounds = array<i64: 4, 1>}, {pipeline_mode = #tpu.pipeline_mode<synchronous>, transform_indices = @transform_5, window_bounds = array<i64: 4, 1>}, {pipeline_mode = #tpu.pipeline_mode<synchronous>, transform_indices = @transform_6, window_bounds = array<i64: 16, 128>}]} {
    %c0 = arith.constant 0 : index
    %c0_0 = arith.constant 0 : index
    %0 = vector.load %arg2[%c0, %c0_0] : memref<8x64xbf16, #tpu.memory_space<vmem>>, vector<8x64xbf16>
    %c0_1 = arith.constant 0 : index
    %c0_2 = arith.constant 0 : index
    %1 = vector.load %arg1[%c0_1, %c0_2] : memref<64x128xbf16, #tpu.memory_space<vmem>>, vector<64x128xbf16>
    %cst = arith.constant dense<0.000000e+00> : vector<8x128xf32>
    %2 = tpu.matmul %0, %1, %cst {dimension_numbers = #tpu.dot_dimension_numbers<[1], [0], [0], [1], [0, 0, 1, 1], [], []>} : vector<8x64xbf16>, vector<64x128xbf16>, vector<8x128xf32> -> vector<8x128xf32>
    %cst_3 = arith.constant 0.000000e+00 : f32
    %3 = vector.broadcast %cst_3 : f32 to vector<8x128xf32>
    %4 = arith.maximumf %2, %3 : vector<8x128xf32>
    %cst_4 = arith.constant 0.000000e+00 : f32
    %5 = vector.broadcast %cst_4 : f32 to vector<16x128xf32>
    %c9_i32 = arith.constant 9 : i32
    %6 = tpu.dynamic_rotate %4 by %c9_i32 dim 1 : vector<8x128xf32>, i32 -> vector<8x128xf32>
    %c0_5 = arith.constant 0 : index
    %c0_6 = arith.constant 0 : index
    %c0_7 = arith.constant 0 : index
    %7 = vector.load %arg4[%c0_5, %c0_6, %c0_7] : memref<9x1x128xf32, #tpu.memory_space<vmem>>, vector<1x1x128xf32>
    %8 = vector.shape_cast %7 : vector<1x1x128xf32> to vector<1x128xf32>
    %9 = vector.broadcast %8 : vector<1x128xf32> to vector<8x128xf32>
    %10 = arith.mulf %6, %9 : vector<8x128xf32>
    %c0_8 = arith.constant 0 : index
    %c0_9 = arith.constant 0 : index
    %c0_10 = arith.constant 0 : index
    %11 = vector.load %arg3[%c0_8, %c0_9, %c0_10] : memref<9x16x8xbf16, #tpu.memory_space<vmem>>, vector<1x16x8xbf16>
    %12 = vector.shape_cast %11 : vector<1x16x8xbf16> to vector<16x8xbf16>
    %13 = arith.truncf %10 : vector<8x128xf32> to vector<8x128xbf16>
    %cst_11 = arith.constant dense<0.000000e+00> : vector<16x128xf32>
    %14 = tpu.matmul %12, %13, %cst_11 {dimension_numbers = #tpu.dot_dimension_numbers<[1], [0], [0], [1], [0, 0, 1, 1], [], []>} : vector<16x8xbf16>, vector<8x128xbf16>, vector<16x128xf32> -> vector<16x128xf32>
    %15 = arith.addf %5, %14 : vector<16x128xf32>
    %c8_i32 = arith.constant 8 : i32
    %16 = tpu.dynamic_rotate %4 by %c8_i32 dim 1 : vector<8x128xf32>, i32 -> vector<8x128xf32>
    %c1 = arith.constant 1 : index
    %c0_12 = arith.constant 0 : index
    %c0_13 = arith.constant 0 : index
    %17 = vector.load %arg4[%c1, %c0_12, %c0_13] : memref<9x1x128xf32, #tpu.memory_space<vmem>>, vector<1x1x128xf32>
    %18 = vector.shape_cast %17 : vector<1x1x128xf32> to vector<1x128xf32>
    %19 = vector.broadcast %18 : vector<1x128xf32> to vector<8x128xf32>
    %20 = arith.mulf %16, %19 : vector<8x128xf32>
    %c1_14 = arith.constant 1 : index
    %c0_15 = arith.constant 0 : index
    %c0_16 = arith.constant 0 : index
    %21 = vector.load %arg3[%c1_14, %c0_15, %c0_16] : memref<9x16x8xbf16, #tpu.memory_space<vmem>>, vector<1x16x8xbf16>
    %22 = vector.shape_cast %21 : vector<1x16x8xbf16> to vector<16x8xbf16>
    %23 = arith.truncf %20 : vector<8x128xf32> to vector<8x128xbf16>
    %cst_17 = arith.constant dense<0.000000e+00> : vector<16x128xf32>
    %24 = tpu.matmul %22, %23, %cst_17 {dimension_numbers = #tpu.dot_dimension_numbers<[1], [0], [0], [1], [0, 0, 1, 1], [], []>} : vector<16x8xbf16>, vector<8x128xbf16>, vector<16x128xf32> -> vector<16x128xf32>
    %25 = arith.addf %15, %24 : vector<16x128xf32>
    %c7_i32 = arith.constant 7 : i32
    %26 = tpu.dynamic_rotate %4 by %c7_i32 dim 1 : vector<8x128xf32>, i32 -> vector<8x128xf32>
    %c2 = arith.constant 2 : index
    %c0_18 = arith.constant 0 : index
    %c0_19 = arith.constant 0 : index
    %27 = vector.load %arg4[%c2, %c0_18, %c0_19] : memref<9x1x128xf32, #tpu.memory_space<vmem>>, vector<1x1x128xf32>
    %28 = vector.shape_cast %27 : vector<1x1x128xf32> to vector<1x128xf32>
    %29 = vector.broadcast %28 : vector<1x128xf32> to vector<8x128xf32>
    %30 = arith.mulf %26, %29 : vector<8x128xf32>
    %c2_20 = arith.constant 2 : index
    %c0_21 = arith.constant 0 : index
    %c0_22 = arith.constant 0 : index
    %31 = vector.load %arg3[%c2_20, %c0_21, %c0_22] : memref<9x16x8xbf16, #tpu.memory_space<vmem>>, vector<1x16x8xbf16>
    %32 = vector.shape_cast %31 : vector<1x16x8xbf16> to vector<16x8xbf16>
    %33 = arith.truncf %30 : vector<8x128xf32> to vector<8x128xbf16>
    %cst_23 = arith.constant dense<0.000000e+00> : vector<16x128xf32>
    %34 = tpu.matmul %32, %33, %cst_23 {dimension_numbers = #tpu.dot_dimension_numbers<[1], [0], [0], [1], [0, 0, 1, 1], [], []>} : vector<16x8xbf16>, vector<8x128xbf16>, vector<16x128xf32> -> vector<16x128xf32>
    %35 = arith.addf %25, %34 : vector<16x128xf32>
    %c1_i32 = arith.constant 1 : i32
    %36 = tpu.dynamic_rotate %4 by %c1_i32 dim 1 : vector<8x128xf32>, i32 -> vector<8x128xf32>
    %c3 = arith.constant 3 : index
    %c0_24 = arith.constant 0 : index
    %c0_25 = arith.constant 0 : index
    %37 = vector.load %arg4[%c3, %c0_24, %c0_25] : memref<9x1x128xf32, #tpu.memory_space<vmem>>, vector<1x1x128xf32>
    %38 = vector.shape_cast %37 : vector<1x1x128xf32> to vector<1x128xf32>
    %39 = vector.broadcast %38 : vector<1x128xf32> to vector<8x128xf32>
    %40 = arith.mulf %36, %39 : vector<8x128xf32>
    %c3_26 = arith.constant 3 : index
    %c0_27 = arith.constant 0 : index
    %c0_28 = arith.constant 0 : index
    %41 = vector.load %arg3[%c3_26, %c0_27, %c0_28] : memref<9x16x8xbf16, #tpu.memory_space<vmem>>, vector<1x16x8xbf16>
    %42 = vector.shape_cast %41 : vector<1x16x8xbf16> to vector<16x8xbf16>
    %43 = arith.truncf %40 : vector<8x128xf32> to vector<8x128xbf16>
    %cst_29 = arith.constant dense<0.000000e+00> : vector<16x128xf32>
    %44 = tpu.matmul %42, %43, %cst_29 {dimension_numbers = #tpu.dot_dimension_numbers<[1], [0], [0], [1], [0, 0, 1, 1], [], []>} : vector<16x8xbf16>, vector<8x128xbf16>, vector<16x128xf32> -> vector<16x128xf32>
    %45 = arith.addf %35, %44 : vector<16x128xf32>
    %c4 = arith.constant 4 : index
    %c0_30 = arith.constant 0 : index
    %c0_31 = arith.constant 0 : index
    %46 = vector.load %arg4[%c4, %c0_30, %c0_31] : memref<9x1x128xf32, #tpu.memory_space<vmem>>, vector<1x1x128xf32>
    %47 = vector.shape_cast %46 : vector<1x1x128xf32> to vector<1x128xf32>
    %48 = vector.broadcast %47 : vector<1x128xf32> to vector<8x128xf32>
    %49 = arith.mulf %4, %48 : vector<8x128xf32>
    %c4_32 = arith.constant 4 : index
    %c0_33 = arith.constant 0 : index
    %c0_34 = arith.constant 0 : index
    %50 = vector.load %arg3[%c4_32, %c0_33, %c0_34] : memref<9x16x8xbf16, #tpu.memory_space<vmem>>, vector<1x16x8xbf16>
    %51 = vector.shape_cast %50 : vector<1x16x8xbf16> to vector<16x8xbf16>
    %52 = arith.truncf %49 : vector<8x128xf32> to vector<8x128xbf16>
    %cst_35 = arith.constant dense<0.000000e+00> : vector<16x128xf32>
    %53 = tpu.matmul %51, %52, %cst_35 {dimension_numbers = #tpu.dot_dimension_numbers<[1], [0], [0], [1], [0, 0, 1, 1], [], []>} : vector<16x8xbf16>, vector<8x128xbf16>, vector<16x128xf32> -> vector<16x128xf32>
    %54 = arith.addf %45, %53 : vector<16x128xf32>
    %c127_i32 = arith.constant 127 : i32
    %55 = tpu.dynamic_rotate %4 by %c127_i32 dim 1 : vector<8x128xf32>, i32 -> vector<8x128xf32>
    %c5 = arith.constant 5 : index
    %c0_36 = arith.constant 0 : index
    %c0_37 = arith.constant 0 : index
    %56 = vector.load %arg4[%c5, %c0_36, %c0_37] : memref<9x1x128xf32, #tpu.memory_space<vmem>>, vector<1x1x128xf32>
    %57 = vector.shape_cast %56 : vector<1x1x128xf32> to vector<1x128xf32>
    %58 = vector.broadcast %57 : vector<1x128xf32> to vector<8x128xf32>
    %59 = arith.mulf %55, %58 : vector<8x128xf32>
    %c5_38 = arith.constant 5 : index
    %c0_39 = arith.constant 0 : index
    %c0_40 = arith.constant 0 : index
    %60 = vector.load %arg3[%c5_38, %c0_39, %c0_40] : memref<9x16x8xbf16, #tpu.memory_space<vmem>>, vector<1x16x8xbf16>
    %61 = vector.shape_cast %60 : vector<1x16x8xbf16> to vector<16x8xbf16>
    %62 = arith.truncf %59 : vector<8x128xf32> to vector<8x128xbf16>
    %cst_41 = arith.constant dense<0.000000e+00> : vector<16x128xf32>
    %63 = tpu.matmul %61, %62, %cst_41 {dimension_numbers = #tpu.dot_dimension_numbers<[1], [0], [0], [1], [0, 0, 1, 1], [], []>} : vector<16x8xbf16>, vector<8x128xbf16>, vector<16x128xf32> -> vector<16x128xf32>
    %64 = arith.addf %54, %63 : vector<16x128xf32>
    %c121_i32 = arith.constant 121 : i32
    %65 = tpu.dynamic_rotate %4 by %c121_i32 dim 1 : vector<8x128xf32>, i32 -> vector<8x128xf32>
    %c6 = arith.constant 6 : index
    %c0_42 = arith.constant 0 : index
    %c0_43 = arith.constant 0 : index
    %66 = vector.load %arg4[%c6, %c0_42, %c0_43] : memref<9x1x128xf32, #tpu.memory_space<vmem>>, vector<1x1x128xf32>
    %67 = vector.shape_cast %66 : vector<1x1x128xf32> to vector<1x128xf32>
    %68 = vector.broadcast %67 : vector<1x128xf32> to vector<8x128xf32>
    %69 = arith.mulf %65, %68 : vector<8x128xf32>
    %c6_44 = arith.constant 6 : index
    %c0_45 = arith.constant 0 : index
    %c0_46 = arith.constant 0 : index
    %70 = vector.load %arg3[%c6_44, %c0_45, %c0_46] : memref<9x16x8xbf16, #tpu.memory_space<vmem>>, vector<1x16x8xbf16>
    %71 = vector.shape_cast %70 : vector<1x16x8xbf16> to vector<16x8xbf16>
    %72 = arith.truncf %69 : vector<8x128xf32> to vector<8x128xbf16>
    %cst_47 = arith.constant dense<0.000000e+00> : vector<16x128xf32>
    %73 = tpu.matmul %71, %72, %cst_47 {dimension_numbers = #tpu.dot_dimension_numbers<[1], [0], [0], [1], [0, 0, 1, 1], [], []>} : vector<16x8xbf16>, vector<8x128xbf16>, vector<16x128xf32> -> vector<16x128xf32>
    %74 = arith.addf %64, %73 : vector<16x128xf32>
    %c120_i32 = arith.constant 120 : i32
    %75 = tpu.dynamic_rotate %4 by %c120_i32 dim 1 : vector<8x128xf32>, i32 -> vector<8x128xf32>
    %c7 = arith.constant 7 : index
    %c0_48 = arith.constant 0 : index
    %c0_49 = arith.constant 0 : index
    %76 = vector.load %arg4[%c7, %c0_48, %c0_49] : memref<9x1x128xf32, #tpu.memory_space<vmem>>, vector<1x1x128xf32>
    %77 = vector.shape_cast %76 : vector<1x1x128xf32> to vector<1x128xf32>
    %78 = vector.broadcast %77 : vector<1x128xf32> to vector<8x128xf32>
    %79 = arith.mulf %75, %78 : vector<8x128xf32>
    %c7_50 = arith.constant 7 : index
    %c0_51 = arith.constant 0 : index
    %c0_52 = arith.constant 0 : index
    %80 = vector.load %arg3[%c7_50, %c0_51, %c0_52] : memref<9x16x8xbf16, #tpu.memory_space<vmem>>, vector<1x16x8xbf16>
    %81 = vector.shape_cast %80 : vector<1x16x8xbf16> to vector<16x8xbf16>
    %82 = arith.truncf %79 : vector<8x128xf32> to vector<8x128xbf16>
    %cst_53 = arith.constant dense<0.000000e+00> : vector<16x128xf32>
    %83 = tpu.matmul %81, %82, %cst_53 {dimension_numbers = #tpu.dot_dimension_numbers<[1], [0], [0], [1], [0, 0, 1, 1], [], []>} : vector<16x8xbf16>, vector<8x128xbf16>, vector<16x128xf32> -> vector<16x128xf32>
    %84 = arith.addf %74, %83 : vector<16x128xf32>
    %c119_i32 = arith.constant 119 : i32
    %85 = tpu.dynamic_rotate %4 by %c119_i32 dim 1 : vector<8x128xf32>, i32 -> vector<8x128xf32>
    %c8 = arith.constant 8 : index
    %c0_54 = arith.constant 0 : index
    %c0_55 = arith.constant 0 : index
    %86 = vector.load %arg4[%c8, %c0_54, %c0_55] : memref<9x1x128xf32, #tpu.memory_space<vmem>>, vector<1x1x128xf32>
    %87 = vector.shape_cast %86 : vector<1x1x128xf32> to vector<1x128xf32>
    %88 = vector.broadcast %87 : vector<1x128xf32> to vector<8x128xf32>
    %89 = arith.mulf %85, %88 : vector<8x128xf32>
    %c8_56 = arith.constant 8 : index
    %c0_57 = arith.constant 0 : index
    %c0_58 = arith.constant 0 : index
    %90 = vector.load %arg3[%c8_56, %c0_57, %c0_58] : memref<9x16x8xbf16, #tpu.memory_space<vmem>>, vector<1x16x8xbf16>
    %91 = vector.shape_cast %90 : vector<1x16x8xbf16> to vector<16x8xbf16>
    %92 = arith.truncf %89 : vector<8x128xf32> to vector<8x128xbf16>
    %cst_59 = arith.constant dense<0.000000e+00> : vector<16x128xf32>
    %93 = tpu.matmul %91, %92, %cst_59 {dimension_numbers = #tpu.dot_dimension_numbers<[1], [0], [0], [1], [0, 0, 1, 1], [], []>} : vector<16x8xbf16>, vector<8x128xbf16>, vector<16x128xf32> -> vector<16x128xf32>
    %94 = arith.addf %84, %93 : vector<16x128xf32>
    %95 = vector.extract_strided_slice %94 {offsets = [0, 0], sizes = [4, 128], strides = [1, 1]} : vector<16x128xf32> to vector<4x128xf32>
    %96 = vector.extract_strided_slice %94 {offsets = [4, 0], sizes = [4, 128], strides = [1, 1]} : vector<16x128xf32> to vector<4x128xf32>
    %97 = vector.extract_strided_slice %94 {offsets = [8, 0], sizes = [4, 128], strides = [1, 1]} : vector<16x128xf32> to vector<4x128xf32>
    %98 = vector.extract_strided_slice %94 {offsets = [12, 0], sizes = [4, 128], strides = [1, 1]} : vector<16x128xf32> to vector<4x128xf32>
    %99 = arith.addf %95, %96 : vector<4x128xf32>
    %100 = arith.addf %99, %97 : vector<4x128xf32>
    %101 = arith.addf %100, %98 : vector<4x128xf32>
    %cst_60 = arith.constant dense<0.000000e+00> : vector<4xf32>
    %102 = vector.multi_reduction <add>, %101, %cst_60 [1] : vector<4x128xf32> to vector<4xf32>
    %103 = vector.shape_cast %102 : vector<4xf32> to vector<4x1xf32>
    %cst_61 = arith.constant 5.120000e+02 : f32
    %104 = vector.broadcast %cst_61 : f32 to vector<4x1xf32>
    %105 = arith.divf %103, %104 : vector<4x1xf32>
    %106 = vector.broadcast %105 : vector<4x1xf32> to vector<4x128xf32>
    %107 = arith.subf %95, %106 : vector<4x128xf32>
    %108 = vector.broadcast %105 : vector<4x1xf32> to vector<4x128xf32>
    %109 = arith.subf %96, %108 : vector<4x128xf32>
    %110 = vector.broadcast %105 : vector<4x1xf32> to vector<4x128xf32>
    %111 = arith.subf %97, %110 : vector<4x128xf32>
    %112 = vector.broadcast %105 : vector<4x1xf32> to vector<4x128xf32>
    %113 = arith.subf %98, %112 : vector<4x128xf32>
    %114 = arith.mulf %107, %107 : vector<4x128xf32>
    %115 = arith.mulf %109, %109 : vector<4x128xf32>
    %116 = arith.addf %114, %115 : vector<4x128xf32>
    %117 = arith.mulf %111, %111 : vector<4x128xf32>
    %118 = arith.addf %116, %117 : vector<4x128xf32>
    %119 = arith.mulf %113, %113 : vector<4x128xf32>
    %120 = arith.addf %118, %119 : vector<4x128xf32>
    %cst_62 = arith.constant dense<0.000000e+00> : vector<4xf32>
    %121 = vector.multi_reduction <add>, %120, %cst_62 [1] : vector<4x128xf32> to vector<4xf32>
    %122 = vector.shape_cast %121 : vector<4xf32> to vector<4x1xf32>
    %cst_63 = arith.constant 5.120000e+02 : f32
    %123 = vector.broadcast %cst_63 : f32 to vector<4x1xf32>
    %124 = arith.divf %122, %123 : vector<4x1xf32>
    %cst_64 = arith.constant 9.99999974E-6 : f32
    %125 = vector.broadcast %cst_64 : f32 to vector<4x1xf32>
    %126 = arith.addf %124, %125 : vector<4x1xf32>
    %127 = math.rsqrt %126 : vector<4x1xf32>
    %c0_65 = arith.constant 0 : index
    %c0_66 = arith.constant 0 : index
    %128 = vector.load %arg5[%c0_65, %c0_66] : memref<4x1xf32, #tpu.memory_space<vmem>>, vector<4x1xf32>
    %129 = arith.mulf %127, %128 : vector<4x1xf32>
    %c0_67 = arith.constant 0 : index
    %c0_68 = arith.constant 0 : index
    %130 = vector.load %arg6[%c0_67, %c0_68] : memref<4x1xf32, #tpu.memory_space<vmem>>, vector<4x1xf32>
    %131 = vector.broadcast %129 : vector<4x1xf32> to vector<4x128xf32>
    %132 = arith.mulf %107, %131 : vector<4x128xf32>
    %133 = vector.broadcast %130 : vector<4x1xf32> to vector<4x128xf32>
    %134 = arith.addf %132, %133 : vector<4x128xf32>
    %135 = vector.broadcast %129 : vector<4x1xf32> to vector<4x128xf32>
    %136 = arith.mulf %109, %135 : vector<4x128xf32>
    %137 = vector.broadcast %130 : vector<4x1xf32> to vector<4x128xf32>
    %138 = arith.addf %136, %137 : vector<4x128xf32>
    %139 = vector.broadcast %129 : vector<4x1xf32> to vector<4x128xf32>
    %140 = arith.mulf %111, %139 : vector<4x128xf32>
    %141 = vector.broadcast %130 : vector<4x1xf32> to vector<4x128xf32>
    %142 = arith.addf %140, %141 : vector<4x128xf32>
    %143 = vector.broadcast %129 : vector<4x1xf32> to vector<4x128xf32>
    %144 = arith.mulf %113, %143 : vector<4x128xf32>
    %145 = vector.broadcast %130 : vector<4x1xf32> to vector<4x128xf32>
    %146 = arith.addf %144, %145 : vector<4x128xf32>
    %147 = tpu.concatenate %134, %138, %142, %146 in 0 : vector<4x128xf32>, vector<4x128xf32>, vector<4x128xf32>, vector<4x128xf32> -> vector<16x128xf32>
    %c0_69 = arith.constant 0 : index
    %c0_70 = arith.constant 0 : index
    %148 = vector.load %arg7[%c0_69, %c0_70] : memref<16x128xf32, #tpu.memory_space<vmem>>, vector<16x128xf32>
    tpu.vector_store %arg7[%c0_69, %c0_70], %147 {strides = array<i32>} : memref<16x128xf32, #tpu.memory_space<vmem>>, vector<16x128xf32>,
    return
  }
  func.func @transform_0(%arg0: i32) -> (i32, i32) {
    %c0_i32 = arith.constant 0 : i32
    %c0_i32_0 = arith.constant 0 : i32
    %c0_i32_1 = arith.constant 0 : i32
    return %c0_i32, %c0_i32_0 : i32, i32
  }
  func.func @transform_1(%arg0: i32) -> (i32, i32) {
    %c0_i32 = arith.constant 0 : i32
    %c0_i32_0 = arith.constant 0 : i32
    %c0_i32_1 = arith.constant 0 : i32
    return %c0_i32, %c0_i32_0 : i32, i32
  }
  func.func @transform_2(%arg0: i32) -> (i32, i32, i32) {
    %c0_i32 = arith.constant 0 : i32
    %c0_i32_0 = arith.constant 0 : i32
    %c0_i32_1 = arith.constant 0 : i32
    %c0_i32_2 = arith.constant 0 : i32
    return %c0_i32, %c0_i32_0, %c0_i32_1 : i32, i32, i32
  }
  func.func @transform_3(%arg0: i32) -> (i32, i32, i32) {
    %c0_i32 = arith.constant 0 : i32
    %c0_i32_0 = arith.constant 0 : i32
    %c0_i32_1 = arith.constant 0 : i32
    %c0_i32_2 = arith.constant 0 : i32
    return %c0_i32, %c0_i32_0, %c0_i32_1 : i32, i32, i32
  }
  func.func @transform_4(%arg0: i32) -> (i32, i32) {
    %c0_i32 = arith.constant 0 : i32
    %c0_i32_0 = arith.constant 0 : i32
    %c0_i32_1 = arith.constant 0 : i32
    return %c0_i32, %c0_i32_0 : i32, i32
  }
  func.func @transform_5(%arg0: i32) -> (i32, i32) {
    %c0_i32 = arith.constant 0 : i32
    %c0_i32_0 = arith.constant 0 : i32
    %c0_i32_1 = arith.constant 0 : i32
    return %c0_i32, %c0_i32_0 : i32, i32
  }
  func.func @transform_6(%arg0: i32) -> (i32, i32) {
    %c0_i32 = arith.constant 0 : i32
    %c0_i32_0 = arith.constant 0 : i32
    %c0_i32_1 = arith.constant 0 : i32
    return %c0_i32, %c0_i32_0 : i32, i32
  }
}

</mosaic_0001>

<llo_original>
// kernel: unet_innermost_forward.1
$region0: #{unet_innermost_forward.1}
  #allocation0 [shape = 'u32[]', space=smem, size = 0x4, offset = 0x4, fixed_abs, tag = 'smem constant byte address 0x4 - core index']
  #allocation1 [shape = 'u32[144,128]{1,0:T(1,128)}', space=vmem, size = 0x12000, scoped, tag = 'internal scratch']
  %s0 = inlined_call_operand.vmem [shape: bf16[64,128], index: 0, kind: input, shape index: {}]
  %s1 = inlined_call_operand.vmem [shape: bf16[8,64], index: 1, kind: input, shape index: {}]
  %s2 = inlined_call_operand.vmem [shape: bf16[9,16,8], index: 2, kind: input, shape index: {}]
  %s3 = inlined_call_operand.vmem [shape: f32[9,1,128], index: 3, kind: input, shape index: {}]
  %s4 = inlined_call_operand.vmem [shape: f32[4,1], index: 4, kind: input, shape index: {}]
  %s5 = inlined_call_operand.vmem [shape: f32[4,1], index: 5, kind: input, shape index: {}]
  %s6 = inlined_call_operand.vmem [shape: f32[16,128], index: 6, kind: output, shape index: {}]
  %s7 = sld [smem:[#allocation0]]
  $region34: #{unet_innermost_forward.1} parent=0
    _
  %s9 = ssub.s32 1, %s7
  %s10 = scalar_select 0, %s9, %s7
  // Predicated region
  $region2: #{unet_innermost_forward.1} parent=0 // pred_check
    _
  $region3: #{unet_innermost_forward.1} parent=0 // pred_check_branch
    %12 = sbr.rel (0) target = $region5
  $region4: #{unet_innermost_forward.1} parent=0 // pred_region
    _
  $region5: #{unet_innermost_forward.1} parent=0 // pred_fallthru
    _
  // Predicated region
  $region6: #{unet_innermost_forward.1} parent=0 // pred_check
    _
  $region7: #{unet_innermost_forward.1} parent=0 // pred_check_branch
    %14 = sbr.rel (0) target = $region9
  $region8: #{unet_innermost_forward.1} parent=0 // pred_region
    _
  $region9: #{unet_innermost_forward.1} parent=0 // pred_fallthru
    _
  // Predicated region
  $region10: #{unet_innermost_forward.1} parent=0 // pred_check
    _
  $region11: #{unet_innermost_forward.1} parent=0 // pred_check_branch
    %16 = sbr.rel (0) target = $region13
  $region12: #{unet_innermost_forward.1} parent=0 // pred_region
    _
  $region13: #{unet_innermost_forward.1} parent=0 // pred_fallthru
    _
  // Predicated region
  $region14: #{unet_innermost_forward.1} parent=0 // pred_check
    _
  $region15: #{unet_innermost_forward.1} parent=0 // pred_check_branch
    %18 = sbr.rel (0) target = $region17
  $region16: #{unet_innermost_forward.1} parent=0 // pred_region
    _
  $region17: #{unet_innermost_forward.1} parent=0 // pred_fallthru
    _
  // Predicated region
  $region18: #{unet_innermost_forward.1} parent=0 // pred_check
    _
  $region19: #{unet_innermost_forward.1} parent=0 // pred_check_branch
    %20 = sbr.rel (0) target = $region21
  $region20: #{unet_innermost_forward.1} parent=0 // pred_region
    _
  $region21: #{unet_innermost_forward.1} parent=0 // pred_fallthru
    _
  // Predicated region
  $region22: #{unet_innermost_forward.1} parent=0 // pred_check
    _
  $region23: #{unet_innermost_forward.1} parent=0 // pred_check_branch
    %22 = sbr.rel (0) target = $region25
  $region24: #{unet_innermost_forward.1} parent=0 // pred_region
    _
  $region25: #{unet_innermost_forward.1} parent=0 // pred_fallthru
    _
  %v24 = vld [vmem:[%s1] sm:$0xf]
  %v25 = vld [vmem:[%s0] sm:$0xf]
  %v26 = vld [vmem:[%s0 + $0x4] sm:$0xf]
  %v27 = vld [vmem:[%s0 + $0x8] sm:$0xf]
  %v28 = vld [vmem:[%s0 + $0xc] sm:$0xf]
  %v29 = vld [vmem:[%s0 + $0x10] sm:$0xf]
  %v30 = vld [vmem:[%s0 + $0x14] sm:$0xf]
  %v31 = vld [vmem:[%s0 + $0x18] sm:$0xf]
  %v32 = vld [vmem:[%s0 + $0x1c] sm:$0xf]
  %v41 = vunpack.c.l.b16 %v25
  %v42 = vunpack.c.l.b16 %v26
  %v43 = vunpack.c.l.b16 %v27
  %v44 = vunpack.c.l.b16 %v28
  %v45 = vunpack.c.l.b16 %v29
  %v46 = vunpack.c.l.b16 %v30
  %v47 = vunpack.c.l.b16 %v31
  %v48 = vunpack.c.l.b16 %v32
  %v49 = vpack.c.b16 %v42, %v41
  %v50 = vpack.c.b16 %v44, %v43
  %v51 = vpack.c.b16 %v46, %v45
  %v52 = vpack.c.b16 %v48, %v47
  %vm57 = vcmask 523264
  %v59 = vsel %vm57, %v24, 0
  %61 = vmatprep.subr.bf16.mxu0 0
  %62 = vmatpush1.bf16.msra.mxu0 0
  %63 = vmatprep.subr.bf16.mxu0 0
  %64 = vmatpush1.bf16.msra.mxu0 0
  %65 = vmatprep.subr.bf16.mxu0 0
  %66 = vmatpush1.bf16.msra.mxu0 0
  %67 = vmatprep.subr.bf16.mxu0 0
  %68 = vmatpush1.bf16.msra.mxu0 0
  %69 = vmatprep.subr.bf16.mxu0 0
  %70 = vmatpush1.bf16.msra.mxu0 %v52
  %71 = vmatprep.subr.bf16.mxu0 0
  %72 = vmatpush1.bf16.msra.mxu0 %v51
  %73 = vmatprep.subr.bf16.mxu0 0
  %74 = vmatpush1.bf16.msra.mxu0 %v50
  %75 = vmatprep.subr.bf16.mxu0 0
  %76 = vmatpush1.bf16.msra.mxu0 %v49
  %77 = vmatprep.subr.bf16.mxu0 0
  %78 = vmatpush2.bf16.msra.mxu0 0
  %79 = vmatprep.subr.bf16.mxu0 0
  %80 = vmatpush2.bf16.msra.mxu0 0
  %81 = vmatprep.subr.bf16.mxu0 0
  %82 = vmatpush2.bf16.msra.mxu0 0
  %83 = vmatprep.subr.bf16.mxu0 0
  %84 = vmatpush2.bf16.msra.mxu0 0
  %85 = vmatprep.subr.bf16.mxu0 0
  %86 = vmatpush2.bf16.msra.mxu0 0
  %87 = vmatprep.subr.bf16.mxu0 0
  %88 = vmatpush2.bf16.msra.mxu0 0
  %89 = vmatprep.subr.bf16.mxu0 0
  %90 = vmatpush2.bf16.msra.mxu0 0
  %91 = vmatprep.subr.bf16.mxu0 0
  %92 = vmatpush2.bf16.msra.mxu0 0
  %93 = vmatprep.mubr.bf16.mxu0 0
  %94 = vmatmul.mubr.bf16.gmra.mxu0 %v59
  %v95 = vpop.f32.mrf.mxu0
  %v96 = vadd.f32 0.0, %v95
  %v97 = vpop.f32.mrf.mxu0
  %v98 = vpop.f32.mrf.mxu0
  %v99 = vpop.f32.mrf.mxu0
  %100 = vdwg.mxu0
  %v101 = vmax.f32 %v96, 0.0
  %102 = vrot.lane.b32.xlu0 %v101, 9
  %v103 = vpop.permute.xlu0 %102
  %v104 = vld [vmem:[%s3] sm:$0x1]
  %v106 = vlaneseq
  %v107 = vshrl.u32 %v106, 7
  %v108 = vsub.s32 0, %v107
  %v109 = vrot.slane %v104, %v108
  %v111 = vmul.f32 %v103, %v109
  %v112 = vld [vmem:[%s2] sm:$0xf]
  %v113 = vld [vmem:[%s2 + $0x4] sm:$0xf]
  %v114 = vpack.c.bf16 %v111, %v111
  %115 = vrot.lane.b32.xlu0 %v101, 8
  %v116 = vpop.permute.xlu0 %115
  %s117 = scalar_lea.vmem %s3, 1
  %v118 = vld [vmem:[%s117] sm:$0x1]
  %v120 = vlaneseq
  %v121 = vshrl.u32 %v120, 7
  %v122 = vsub.s32 0, %v121
  %v123 = vrot.slane %v118, %v122
  %v125 = vmul.f32 %v116, %v123
  %s126 = scalar_lea.vmem %s2, 8
  %v127 = vld [vmem:[%s126] sm:$0xf]
  %v128 = vld [vmem:[%s126 + $0x4] sm:$0xf]
  %v129 = vpack.c.bf16 %v125, %v125
  %v132 = vunpack.c.l.b16 %v127
  %v133 = vunpack.c.l.b16 %v128
  %v134 = vpack.c.b16 %v133, %v132
  %vm135 = vcmask 64512
  %v137 = vsel %vm135, %v134, 0
  %vm139 = vcmask 1043456
  %v141 = vsel %vm139, %v129, 0
  %143 = vmatprep.subr.bf16.mxu0 0
  %144 = vmatpush1.bf16.msra.mxu0 0
  %145 = vmatprep.subr.bf16.mxu0 0
  %146 = vmatpush1.bf16.msra.mxu0 0
  %147 = vmatprep.subr.bf16.mxu0 0
  %148 = vmatpush1.bf16.msra.mxu0 0
  %149 = vmatprep.subr.bf16.mxu0 0
  %150 = vmatpush1.bf16.msra.mxu0 0
  %151 = vmatprep.subr.bf16.mxu0 0
  %152 = vmatpush1.bf16.msra.mxu0 0
  %153 = vmatprep.subr.bf16.mxu0 0
  %154 = vmatpush1.bf16.msra.mxu0 0
  %155 = vmatprep.subr.bf16.mxu0 0
  %156 = vmatpush1.bf16.msra.mxu0 0
  %157 = vmatprep.subr.bf16.mxu0 0
  %158 = vmatpush1.bf16.msra.mxu0 %v141
  %159 = vmatprep.subr.bf16.mxu0 0
  %160 = vmatpush2.bf16.msra.mxu0 0
  %161 = vmatprep.subr.bf16.mxu0 0
  %162 = vmatpush2.bf16.msra.mxu0 0
  %163 = vmatprep.subr.bf16.mxu0 0
  %164 = vmatpush2.bf16.msra.mxu0 0
  %165 = vmatprep.subr.bf16.mxu0 0
  %166 = vmatpush2.bf16.msra.mxu0 0
  %167 = vmatprep.subr.bf16.mxu0 0
  %168 = vmatpush2.bf16.msra.mxu0 0
  %169 = vmatprep.subr.bf16.mxu0 0
  %170 = vmatpush2.bf16.msra.mxu0 0
  %171 = vmatprep.subr.bf16.mxu0 0
  %172 = vmatpush2.bf16.msra.mxu0 0
  %173 = vmatprep.subr.bf16.mxu0 0
  %174 = vmatpush2.bf16.msra.mxu0 0
  %175 = vmatprep.mubr.bf16.mxu0 0
  %176 = vmatmul.mubr.bf16.gmra.mxu0 %v137
  %v177 = vpop.f32.mrf.mxu0
  %v178 = vadd.f32 0.0, %v177
  %v179 = vpop.f32.mrf.mxu0
  %v180 = vpop.f32.mrf.mxu0
  %v181 = vadd.f32 0.0, %v180
  %v182 = vpop.f32.mrf.mxu0
  %183 = vdwg.mxu0
  %v186 = vunpack.c.l.b16 %v112
  %v187 = vunpack.c.l.b16 %v113
  %v188 = vpack.c.b16 %v187, %v186
  %v190 = vsel %vm135, %v188, 0
  %v193 = vsel %vm139, %v114, 0
  %195 = vmatprep.subr.bf16.mxu0 0
  %196 = vmatpush1.bf16.msra.mxu0 0
  %197 = vmatprep.subr.bf16.mxu0 0
  %198 = vmatpush1.bf16.msra.mxu0 0
  %199 = vmatprep.subr.bf16.mxu0 0
  %200 = vmatpush1.bf16.msra.mxu0 0
  %201 = vmatprep.subr.bf16.mxu0 0
  %202 = vmatpush1.bf16.msra.mxu0 0
  %203 = vmatprep.subr.bf16.mxu0 0
  %204 = vmatpush1.bf16.msra.mxu0 0
  %205 = vmatprep.subr.bf16.mxu0 0
  %206 = vmatpush1.bf16.msra.mxu0 0
  %207 = vmatprep.subr.bf16.mxu0 0
  %208 = vmatpush1.bf16.msra.mxu0 0
  %209 = vmatprep.subr.bf16.mxu0 0
  %210 = vmatpush1.bf16.msra.mxu0 %v193
  %211 = vmatprep.subr.bf16.mxu0 0
  %212 = vmatpush2.bf16.msra.mxu0 0
  %213 = vmatprep.subr.bf16.mxu0 0
  %214 = vmatpush2.bf16.msra.mxu0 0
  %215 = vmatprep.subr.bf16.mxu0 0
  %216 = vmatpush2.bf16.msra.mxu0 0
  %217 = vmatprep.subr.bf16.mxu0 0
  %218 = vmatpush2.bf16.msra.mxu0 0
  %219 = vmatprep.subr.bf16.mxu0 0
  %220 = vmatpush2.bf16.msra.mxu0 0
  %221 = vmatprep.subr.bf16.mxu0 0
  %222 = vmatpush2.bf16.msra.mxu0 0
  %223 = vmatprep.subr.bf16.mxu0 0
  %224 = vmatpush2.bf16.msra.mxu0 0
  %225 = vmatprep.subr.bf16.mxu0 0
  %226 = vmatpush2.bf16.msra.mxu0 0
  %227 = vmatprep.mubr.bf16.mxu0 0
  %228 = vmatmul.mubr.bf16.gmra.mxu0 %v190
  %v229 = vpop.f32.mrf.mxu0
  %v230 = vadd.f32 %v178, %v229
  %v231 = vpop.f32.mrf.mxu0
  %v232 = vpop.f32.mrf.mxu0
  %v233 = vadd.f32 %v181, %v232
  %v234 = vpop.f32.mrf.mxu0
  %235 = vdwg.mxu0
  %236 = vrot.lane.b32.xlu0 %v101, 7
  %v237 = vpop.permute.xlu0 %236
  %s238 = scalar_lea.vmem %s3, 2
  %v239 = vld [vmem:[%s238] sm:$0x1]
  %v241 = vlaneseq
  %v242 = vshrl.u32 %v241, 7
  %v243 = vsub.s32 0, %v242
  %v244 = vrot.slane %v239, %v243
  %v246 = vmul.f32 %v237, %v244
  %s247 = scalar_lea.vmem %s2, 16
  %v248 = vld [vmem:[%s247] sm:$0xf]
  %v249 = vld [vmem:[%s247 + $0x4] sm:$0xf]
  %v250 = vpack.c.bf16 %v246, %v246
  %v253 = vunpack.c.l.b16 %v248
  %v254 = vunpack.c.l.b16 %v249
  %v255 = vpack.c.b16 %v254, %v253
  %v257 = vsel %vm135, %v255, 0
  %v260 = vsel %vm139, %v250, 0
  %262 = vmatprep.subr.bf16.mxu0 0
  %263 = vmatpush1.bf16.msra.mxu0 0
  %264 = vmatprep.subr.bf16.mxu0 0
  %265 = vmatpush1.bf16.msra.mxu0 0
  %266 = vmatprep.subr.bf16.mxu0 0
  %267 = vmatpush1.bf16.msra.mxu0 0
  %268 = vmatprep.subr.bf16.mxu0 0
  %269 = vmatpush1.bf16.msra.mxu0 0
  %270 = vmatprep.subr.bf16.mxu0 0
  %271 = vmatpush1.bf16.msra.mxu0 0
  %272 = vmatprep.subr.bf16.mxu0 0
  %273 = vmatpush1.bf16.msra.mxu0 0
  %274 = vmatprep.subr.bf16.mxu0 0
  %275 = vmatpush1.bf16.msra.mxu0 0
  %276 = vmatprep.subr.bf16.mxu0 0
  %277 = vmatpush1.bf16.msra.mxu0 %v260
  %278 = vmatprep.subr.bf16.mxu0 0
  %279 = vmatpush2.bf16.msra.mxu0 0
  %280 = vmatprep.subr.bf16.mxu0 0
  %281 = vmatpush2.bf16.msra.mxu0 0
  %282 = vmatprep.subr.bf16.mxu0 0
  %283 = vmatpush2.bf16.msra.mxu0 0
  %284 = vmatprep.subr.bf16.mxu0 0
  %285 = vmatpush2.bf16.msra.mxu0 0
  %286 = vmatprep.subr.bf16.mxu0 0
  %287 = vmatpush2.bf16.msra.mxu0 0
  %288 = vmatprep.subr.bf16.mxu0 0
  %289 = vmatpush2.bf16.msra.mxu0 0
  %290 = vmatprep.subr.bf16.mxu0 0
  %291 = vmatpush2.bf16.msra.mxu0 0
  %292 = vmatprep.subr.bf16.mxu0 0
  %293 = vmatpush2.bf16.msra.mxu0 0
  %294 = vmatprep.mubr.bf16.mxu0 0
  %295 = vmatmul.mubr.bf16.gmra.mxu0 %v257
  %v296 = vpop.f32.mrf.mxu0
  %v297 = vadd.f32 0.0, %v296
  %v298 = vpop.f32.mrf.mxu0
  %v299 = vpop.f32.mrf.mxu0
  %v300 = vadd.f32 0.0, %v299
  %v301 = vpop.f32.mrf.mxu0
  %302 = vdwg.mxu0
  %v303 = vadd.f32 %v230, %v297
  %v304 = vadd.f32 %v233, %v300
  %305 = vrot.lane.b32.xlu0 %v101, 1
  %v306 = vpop.permute.xlu0 %305
  %s307 = scalar_lea.vmem %s3, 3
  %v308 = vld [vmem:[%s307] sm:$0x1]
  %v310 = vlaneseq
  %v311 = vshrl.u32 %v310, 7
  %v312 = vsub.s32 0, %v311
  %v313 = vrot.slane %v308, %v312
  %v315 = vmul.f32 %v306, %v313
  %s316 = scalar_lea.vmem %s2, 24
  %v317 = vld [vmem:[%s316] sm:$0xf]
  %v318 = vld [vmem:[%s316 + $0x4] sm:$0xf]
  %v319 = vpack.c.bf16 %v315, %v315
  %v322 = vunpack.c.l.b16 %v317
  %v323 = vunpack.c.l.b16 %v318
  %v324 = vpack.c.b16 %v323, %v322
  %v326 = vsel %vm135, %v324, 0
  %v329 = vsel %vm139, %v319, 0
  %331 = vmatprep.subr.bf16.mxu0 0
  %332 = vmatpush1.bf16.msra.mxu0 0
  %333 = vmatprep.subr.bf16.mxu0 0
  %334 = vmatpush1.bf16.msra.mxu0 0
  %335 = vmatprep.subr.bf16.mxu0 0
  %336 = vmatpush1.bf16.msra.mxu0 0
  %337 = vmatprep.subr.bf16.mxu0 0
  %338 = vmatpush1.bf16.msra.mxu0 0
  %339 = vmatprep.subr.bf16.mxu0 0
  %340 = vmatpush1.bf16.msra.mxu0 0
  %341 = vmatprep.subr.bf16.mxu0 0
  %342 = vmatpush1.bf16.msra.mxu0 0
  %343 = vmatprep.subr.bf16.mxu0 0
  %344 = vmatpush1.bf16.msra.mxu0 0
  %345 = vmatprep.subr.bf16.mxu0 0
  %346 = vmatpush1.bf16.msra.mxu0 %v329
  %347 = vmatprep.subr.bf16.mxu0 0
  %348 = vmatpush2.bf16.msra.mxu0 0
  %349 = vmatprep.subr.bf16.mxu0 0
  %350 = vmatpush2.bf16.msra.mxu0 0
  %351 = vmatprep.subr.bf16.mxu0 0
  %352 = vmatpush2.bf16.msra.mxu0 0
  %353 = vmatprep.subr.bf16.mxu0 0
  %354 = vmatpush2.bf16.msra.mxu0 0
  %355 = vmatprep.subr.bf16.mxu0 0
  %356 = vmatpush2.bf16.msra.mxu0 0
  %357 = vmatprep.subr.bf16.mxu0 0
  %358 = vmatpush2.bf16.msra.mxu0 0
  %359 = vmatprep.subr.bf16.mxu0 0
  %360 = vmatpush2.bf16.msra.mxu0 0
  %361 = vmatprep.subr.bf16.mxu0 0
  %362 = vmatpush2.bf16.msra.mxu0 0
  %363 = vmatprep.mubr.bf16.mxu0 0
  %364 = vmatmul.mubr.bf16.gmra.mxu0 %v326
  %v365 = vpop.f32.mrf.mxu0
  %v366 = vadd.f32 0.0, %v365
  %v367 = vpop.f32.mrf.mxu0
  %v368 = vpop.f32.mrf.mxu0
  %v369 = vadd.f32 0.0, %v368
  %v370 = vpop.f32.mrf.mxu0
  %371 = vdwg.mxu0
  %v372 = vadd.f32 %v303, %v366
  %v373 = vadd.f32 %v304, %v369
  %s374 = scalar_lea.vmem %s3, 4
  %v375 = vld [vmem:[%s374] sm:$0x1]
  %v377 = vlaneseq
  %v378 = vshrl.u32 %v377, 7
  %v379 = vsub.s32 0, %v378
  %v380 = vrot.slane %v375, %v379
  %v382 = vmul.f32 %v101, %v380
  %s383 = scalar_lea.vmem %s2, 32
  %v384 = vld [vmem:[%s383] sm:$0xf]
  %v385 = vld [vmem:[%s383 + $0x4] sm:$0xf]
  %v386 = vpack.c.bf16 %v382, %v382
  %v389 = vunpack.c.l.b16 %v384
  %v390 = vunpack.c.l.b16 %v385
  %v391 = vpack.c.b16 %v390, %v389
  %v393 = vsel %vm135, %v391, 0
  %v396 = vsel %vm139, %v386, 0
  %398 = vmatprep.subr.bf16.mxu0 0
  %399 = vmatpush1.bf16.msra.mxu0 0
  %400 = vmatprep.subr.bf16.mxu0 0
  %401 = vmatpush1.bf16.msra.mxu0 0
  %402 = vmatprep.subr.bf16.mxu0 0
  %403 = vmatpush1.bf16.msra.mxu0 0
  %404 = vmatprep.subr.bf16.mxu0 0
  %405 = vmatpush1.bf16.msra.mxu0 0
  %406 = vmatprep.subr.bf16.mxu0 0
  %407 = vmatpush1.bf16.msra.mxu0 0
  %408 = vmatprep.subr.bf16.mxu0 0
  %409 = vmatpush1.bf16.msra.mxu0 0
  %410 = vmatprep.subr.bf16.mxu0 0
  %411 = vmatpush1.bf16.msra.mxu0 0
  %412 = vmatprep.subr.bf16.mxu0 0
  %413 = vmatpush1.bf16.msra.mxu0 %v396
  %414 = vmatprep.subr.bf16.mxu0 0
  %415 = vmatpush2.bf16.msra.mxu0 0
  %416 = vmatprep.subr.bf16.mxu0 0
  %417 = vmatpush2.bf16.msra.mxu0 0
  %418 = vmatprep.subr.bf16.mxu0 0
  %419 = vmatpush2.bf16.msra.mxu0 0
  %420 = vmatprep.subr.bf16.mxu0 0
  %421 = vmatpush2.bf16.msra.mxu0 0
  %422 = vmatprep.subr.bf16.mxu0 0
  %423 = vmatpush2.bf16.msra.mxu0 0
  %424 = vmatprep.subr.bf16.mxu0 0
  %425 = vmatpush2.bf16.msra.mxu0 0
  %426 = vmatprep.subr.bf16.mxu0 0
  %427 = vmatpush2.bf16.msra.mxu0 0
  %428 = vmatprep.subr.bf16.mxu0 0
  %429 = vmatpush2.bf16.msra.mxu0 0
  %430 = vmatprep.mubr.bf16.mxu0 0
  %431 = vmatmul.mubr.bf16.gmra.mxu0 %v393
  %v432 = vpop.f32.mrf.mxu0
  %v433 = vadd.f32 0.0, %v432
  %v434 = vpop.f32.mrf.mxu0
  %v435 = vpop.f32.mrf.mxu0
  %v436 = vadd.f32 0.0, %v435
  %v437 = vpop.f32.mrf.mxu0
  %438 = vdwg.mxu0
  %v439 = vadd.f32 %v372, %v433
  %v440 = vadd.f32 %v373, %v436
  %441 = vrot.lane.b32.xlu0 %v101, 127
  %v442 = vpop.permute.xlu0 %441
  %s443 = scalar_lea.vmem %s3, 5
  %v444 = vld [vmem:[%s443] sm:$0x1]
  %v446 = vlaneseq
  %v447 = vshrl.u32 %v446, 7
  %v448 = vsub.s32 0, %v447
  %v449 = vrot.slane %v444, %v448
  %v451 = vmul.f32 %v442, %v449
  %s452 = scalar_lea.vmem %s2, 40
  %v453 = vld [vmem:[%s452] sm:$0xf]
  %v454 = vld [vmem:[%s452 + $0x4] sm:$0xf]
  %v455 = vpack.c.bf16 %v451, %v451
  %v458 = vunpack.c.l.b16 %v453
  %v459 = vunpack.c.l.b16 %v454
  %v460 = vpack.c.b16 %v459, %v458
  %v462 = vsel %vm135, %v460, 0
  %v465 = vsel %vm139, %v455, 0
  %467 = vmatprep.subr.bf16.mxu0 0
  %468 = vmatpush1.bf16.msra.mxu0 0
  %469 = vmatprep.subr.bf16.mxu0 0
  %470 = vmatpush1.bf16.msra.mxu0 0
  %471 = vmatprep.subr.bf16.mxu0 0
  %472 = vmatpush1.bf16.msra.mxu0 0
  %473 = vmatprep.subr.bf16.mxu0 0
  %474 = vmatpush1.bf16.msra.mxu0 0
  %475 = vmatprep.subr.bf16.mxu0 0
  %476 = vmatpush1.bf16.msra.mxu0 0
  %477 = vmatprep.subr.bf16.mxu0 0
  %478 = vmatpush1.bf16.msra.mxu0 0
  %479 = vmatprep.subr.bf16.mxu0 0
  %480 = vmatpush1.bf16.msra.mxu0 0
  %481 = vmatprep.subr.bf16.mxu0 0
  %482 = vmatpush1.bf16.msra.mxu0 %v465
  %483 = vmatprep.subr.bf16.mxu0 0
  %484 = vmatpush2.bf16.msra.mxu0 0
  %485 = vmatprep.subr.bf16.mxu0 0
  %486 = vmatpush2.bf16.msra.mxu0 0
  %487 = vmatprep.subr.bf16.mxu0 0
  %488 = vmatpush2.bf16.msra.mxu0 0
  %489 = vmatprep.subr.bf16.mxu0 0
  %490 = vmatpush2.bf16.msra.mxu0 0
  %491 = vmatprep.subr.bf16.mxu0 0
  %492 = vmatpush2.bf16.msra.mxu0 0
  %493 = vmatprep.subr.bf16.mxu0 0
  %494 = vmatpush2.bf16.msra.mxu0 0
  %495 = vmatprep.subr.bf16.mxu0 0
  %496 = vmatpush2.bf16.msra.mxu0 0
  %497 = vmatprep.subr.bf16.mxu0 0
  %498 = vmatpush2.bf16.msra.mxu0 0
  %499 = vmatprep.mubr.bf16.mxu0 0
  %500 = vmatmul.mubr.bf16.gmra.mxu0 %v462
  %v501 = vpop.f32.mrf.mxu0
  %v502 = vadd.f32 0.0, %v501
  %v503 = vpop.f32.mrf.mxu0
  %v504 = vpop.f32.mrf.mxu0
  %v505 = vadd.f32 0.0, %v504
  %v506 = vpop.f32.mrf.mxu0
  %507 = vdwg.mxu0
  %v508 = vadd.f32 %v439, %v502
  %v509 = vadd.f32 %v440, %v505
  %510 = vrot.lane.b32.xlu0 %v101, 121
  %v511 = vpop.permute.xlu0 %510
  %s512 = scalar_lea.vmem %s3, 6
  %v513 = vld [vmem:[%s512] sm:$0x1]
  %v515 = vlaneseq
  %v516 = vshrl.u32 %v515, 7
  %v517 = vsub.s32 0, %v516
  %v518 = vrot.slane %v513, %v517
  %v520 = vmul.f32 %v511, %v518
  %s521 = scalar_lea.vmem %s2, 48
  %v522 = vld [vmem:[%s521] sm:$0xf]
  %v523 = vld [vmem:[%s521 + $0x4] sm:$0xf]
  %v524 = vpack.c.bf16 %v520, %v520
  %v527 = vunpack.c.l.b16 %v522
  %v528 = vunpack.c.l.b16 %v523
  %v529 = vpack.c.b16 %v528, %v527
  %v531 = vsel %vm135, %v529, 0
  %v534 = vsel %vm139, %v524, 0
  %536 = vmatprep.subr.bf16.mxu0 0
  %537 = vmatpush1.bf16.msra.mxu0 0
  %538 = vmatprep.subr.bf16.mxu0 0
  %539 = vmatpush1.bf16.msra.mxu0 0
  %540 = vmatprep.subr.bf16.mxu0 0
  %541 = vmatpush1.bf16.msra.mxu0 0
  %542 = vmatprep.subr.bf16.mxu0 0
  %543 = vmatpush1.bf16.msra.mxu0 0
  %544 = vmatprep.subr.bf16.mxu0 0
  %545 = vmatpush1.bf16.msra.mxu0 0
  %546 = vmatprep.subr.bf16.mxu0 0
  %547 = vmatpush1.bf16.msra.mxu0 0
  %548 = vmatprep.subr.bf16.mxu0 0
  %549 = vmatpush1.bf16.msra.mxu0 0
  %550 = vmatprep.subr.bf16.mxu0 0
  %551 = vmatpush1.bf16.msra.mxu0 %v534
  %552 = vmatprep.subr.bf16.mxu0 0
  %553 = vmatpush2.bf16.msra.mxu0 0
  %554 = vmatprep.subr.bf16.mxu0 0
  %555 = vmatpush2.bf16.msra.mxu0 0
  %556 = vmatprep.subr.bf16.mxu0 0
  %557 = vmatpush2.bf16.msra.mxu0 0
  %558 = vmatprep.subr.bf16.mxu0 0
  %559 = vmatpush2.bf16.msra.mxu0 0
  %560 = vmatprep.subr.bf16.mxu0 0
  %561 = vmatpush2.bf16.msra.mxu0 0
  %562 = vmatprep.subr.bf16.mxu0 0
  %563 = vmatpush2.bf16.msra.mxu0 0
  %564 = vmatprep.subr.bf16.mxu0 0
  %565 = vmatpush2.bf16.msra.mxu0 0
  %566 = vmatprep.subr.bf16.mxu0 0
  %567 = vmatpush2.bf16.msra.mxu0 0
  %568 = vmatprep.mubr.bf16.mxu0 0
  %569 = vmatmul.mubr.bf16.gmra.mxu0 %v531
  %v570 = vpop.f32.mrf.mxu0
  %v571 = vadd.f32 0.0, %v570
  %v572 = vpop.f32.mrf.mxu0
  %v573 = vpop.f32.mrf.mxu0
  %v574 = vadd.f32 0.0, %v573
  %v575 = vpop.f32.mrf.mxu0
  %576 = vdwg.mxu0
  %v577 = vadd.f32 %v508, %v571
  %v578 = vadd.f32 %v509, %v574
  %579 = vrot.lane.b32.xlu0 %v101, 120
  %v580 = vpop.permute.xlu0 %579
  %s581 = scalar_lea.vmem %s3, 7
  %v582 = vld [vmem:[%s581] sm:$0x1]
  %v584 = vlaneseq
  %v585 = vshrl.u32 %v584, 7
  %v586 = vsub.s32 0, %v585
  %v587 = vrot.slane %v582, %v586
  %v589 = vmul.f32 %v580, %v587
  %s590 = scalar_lea.vmem %s2, 56
  %v591 = vld [vmem:[%s590] sm:$0xf]
  %v592 = vld [vmem:[%s590 + $0x4] sm:$0xf]
  %v593 = vpack.c.bf16 %v589, %v589
  %v596 = vunpack.c.l.b16 %v591
  %v597 = vunpack.c.l.b16 %v592
  %v598 = vpack.c.b16 %v597, %v596
  %v600 = vsel %vm135, %v598, 0
  %v603 = vsel %vm139, %v593, 0
  %605 = vmatprep.subr.bf16.mxu0 0
  %606 = vmatpush1.bf16.msra.mxu0 0
  %607 = vmatprep.subr.bf16.mxu0 0
  %608 = vmatpush1.bf16.msra.mxu0 0
  %609 = vmatprep.subr.bf16.mxu0 0
  %610 = vmatpush1.bf16.msra.mxu0 0
  %611 = vmatprep.subr.bf16.mxu0 0
  %612 = vmatpush1.bf16.msra.mxu0 0
  %613 = vmatprep.subr.bf16.mxu0 0
  %614 = vmatpush1.bf16.msra.mxu0 0
  %615 = vmatprep.subr.bf16.mxu0 0
  %616 = vmatpush1.bf16.msra.mxu0 0
  %617 = vmatprep.subr.bf16.mxu0 0
  %618 = vmatpush1.bf16.msra.mxu0 0
  %619 = vmatprep.subr.bf16.mxu0 0
  %620 = vmatpush1.bf16.msra.mxu0 %v603
  %621 = vmatprep.subr.bf16.mxu0 0
  %622 = vmatpush2.bf16.msra.mxu0 0
  %623 = vmatprep.subr.bf16.mxu0 0
  %624 = vmatpush2.bf16.msra.mxu0 0
  %625 = vmatprep.subr.bf16.mxu0 0
  %626 = vmatpush2.bf16.msra.mxu0 0
  %627 = vmatprep.subr.bf16.mxu0 0
  %628 = vmatpush2.bf16.msra.mxu0 0
  %629 = vmatprep.subr.bf16.mxu0 0
  %630 = vmatpush2.bf16.msra.mxu0 0
  %631 = vmatprep.subr.bf16.mxu0 0
  %632 = vmatpush2.bf16.msra.mxu0 0
  %633 = vmatprep.subr.bf16.mxu0 0
  %634 = vmatpush2.bf16.msra.mxu0 0
  %635 = vmatprep.subr.bf16.mxu0 0
  %636 = vmatpush2.bf16.msra.mxu0 0
  %637 = vmatprep.mubr.bf16.mxu0 0
  %638 = vmatmul.mubr.bf16.gmra.mxu0 %v600
  %v639 = vpop.f32.mrf.mxu0
  %v640 = vadd.f32 0.0, %v639
  %v641 = vpop.f32.mrf.mxu0
  %v642 = vpop.f32.mrf.mxu0
  %v643 = vadd.f32 0.0, %v642
  %v644 = vpop.f32.mrf.mxu0
  %645 = vdwg.mxu0
  %v646 = vadd.f32 %v577, %v640
  %v647 = vadd.f32 %v578, %v643
  %648 = vrot.lane.b32.xlu0 %v101, 119
  %v649 = vpop.permute.xlu0 %648
  %s650 = scalar_lea.vmem %s3, 8
  %v651 = vld [vmem:[%s650] sm:$0x1]
  %v653 = vlaneseq
  %v654 = vshrl.u32 %v653, 7
  %v655 = vsub.s32 0, %v654
  %v656 = vrot.slane %v651, %v655
  %v658 = vmul.f32 %v649, %v656
  %s659 = scalar_lea.vmem %s2, 64
  %v660 = vld [vmem:[%s659] sm:$0xf]
  %v661 = vld [vmem:[%s659 + $0x4] sm:$0xf]
  %v662 = vpack.c.bf16 %v658, %v658
  %v665 = vunpack.c.l.b16 %v660
  %v666 = vunpack.c.l.b16 %v661
  %v667 = vpack.c.b16 %v666, %v665
  %v669 = vsel %vm135, %v667, 0
  %v672 = vsel %vm139, %v662, 0
  %674 = vmatprep.subr.bf16.mxu0 0
  %675 = vmatpush1.bf16.msra.mxu0 0
  %676 = vmatprep.subr.bf16.mxu0 0
  %677 = vmatpush1.bf16.msra.mxu0 0
  %678 = vmatprep.subr.bf16.mxu0 0
  %679 = vmatpush1.bf16.msra.mxu0 0
  %680 = vmatprep.subr.bf16.mxu0 0
  %681 = vmatpush1.bf16.msra.mxu0 0
  %682 = vmatprep.subr.bf16.mxu0 0
  %683 = vmatpush1.bf16.msra.mxu0 0
  %684 = vmatprep.subr.bf16.mxu0 0
  %685 = vmatpush1.bf16.msra.mxu0 0
  %686 = vmatprep.subr.bf16.mxu0 0
  %687 = vmatpush1.bf16.msra.mxu0 0
  %688 = vmatprep.subr.bf16.mxu0 0
  %689 = vmatpush1.bf16.msra.mxu0 %v672
  %690 = vmatprep.subr.bf16.mxu0 0
  %691 = vmatpush2.bf16.msra.mxu0 0
  %692 = vmatprep.subr.bf16.mxu0 0
  %693 = vmatpush2.bf16.msra.mxu0 0
  %694 = vmatprep.subr.bf16.mxu0 0
  %695 = vmatpush2.bf16.msra.mxu0 0
  %696 = vmatprep.subr.bf16.mxu0 0
  %697 = vmatpush2.bf16.msra.mxu0 0
  %698 = vmatprep.subr.bf16.mxu0 0
  %699 = vmatpush2.bf16.msra.mxu0 0
  %700 = vmatprep.subr.bf16.mxu0 0
  %701 = vmatpush2.bf16.msra.mxu0 0
  %702 = vmatprep.subr.bf16.mxu0 0
  %703 = vmatpush2.bf16.msra.mxu0 0
  %704 = vmatprep.subr.bf16.mxu0 0
  %705 = vmatpush2.bf16.msra.mxu0 0
  %706 = vmatprep.mubr.bf16.mxu0 0
  %707 = vmatmul.mubr.bf16.gmra.mxu0 %v669
  %v708 = vpop.f32.mrf.mxu0
  %v709 = vadd.f32 0.0, %v708
  %v710 = vpop.f32.mrf.mxu0
  %v711 = vpop.f32.mrf.mxu0
  %v712 = vadd.f32 0.0, %v711
  %v713 = vpop.f32.mrf.mxu0
  %714 = vdwg.mxu0
  %v715 = vadd.f32 %v646, %v709
  %v716 = vadd.f32 %v647, %v712
  %v718 = vrot.slane %v715, 4
  %v720 = vadd.f32 %v715, %v718
  %v721 = vadd.f32 %v720, %v716
  %v723 = vrot.slane %v716, 4
  %v725 = vadd.f32 %v721, %v723
  %v726 = vsel %vm139, %v725, 0.0
  %727 = vadd.xlane.f32.xlu0 %v726
  %v728 = vpop.xlane.xlu0 %727
  %v729 = vrcp.pop 512.0
  %v730 = vmul.f32 %v728, %v729
  %v731 = vsub.f32 %v715, %v730
  %v733 = vrot.slane %v730, 4
  %v735 = vsub.f32 %v715, %v733
  %v736 = vsub.f32 %v716, %v730
  %v737 = vsub.f32 %v716, %v733
  %v738 = vmul.f32 %v731, %v731
  %v739 = vmul.f32 %v735, %v735
  %v741 = vrot.slane %v739, 4
  %v743 = vadd.f32 %v738, %v741
  %v744 = vmul.f32 %v736, %v736
  %v745 = vadd.f32 %v743, %v744
  %v746 = vmul.f32 %v737, %v737
  %v748 = vrot.slane %v746, 4
  %v750 = vadd.f32 %v745, %v748
  %v751 = vsel %vm139, %v750, 0.0
  %752 = vadd.xlane.f32.xlu0 %v751
  %v753 = vpop.xlane.xlu0 %752
  %v754 = vmul.f32 %v753, %v729
  %v755 = vadd.f32 %v754, 1e-05
  %v756 = vrsqrt.pop %v755
  %v757 = vld [vmem:[%s4] sm:$0xf]
  %v758 = vmul.f32 %v756, %v757
  %v759 = vld [vmem:[%s5] sm:$0xf]
  %761 = vset.pattern.permute.xlu0 0
  %762 = vperm.xlu0 %761, %v758
  %v763 = vpop.permute.xlu0 %762
  %v765 = vmul.f32 %v731, %v763
  %767 = vset.pattern.permute.xlu0 0
  %768 = vperm.xlu0 %767, %v759
  %v769 = vpop.permute.xlu0 %768
  %v771 = vadd.f32 %v765, %v769
  %v772 = vrot.slane %v763, 4
  %v774 = vmul.f32 %v735, %v772
  %v775 = vrot.slane %v769, 4
  %v777 = vadd.f32 %v774, %v775
  %v778 = vmul.f32 %v736, %v763
  %v779 = vadd.f32 %v778, %v769
  %v780 = vmul.f32 %v737, %v772
  %v781 = vadd.f32 %v780, %v775
  %v782 = vsel %vm139, %v771, %v777
  %v783 = vsel %vm139, %v779, %v781
  %784 = vst [vmem:[%s6] sm:$0xff] %v782
  %785 = vst [vmem:[%s6 + $0x8] sm:$0xff] %v783
  // Predicated region
  $region26: #{unet_innermost_forward.1} parent=0 // pred_check
    _
  $region27: #{unet_innermost_forward.1} parent=0 // pred_check_branch
    %787 = sbr.rel (0) target = $region29
  $region28: #{unet_innermost_forward.1} parent=0 // pred_region
    _
  $region29: #{unet_innermost_forward.1} parent=0 // pred_fallthru
    _
  // Predicated region
  $region30: #{unet_innermost_forward.1} parent=0 // pred_check
    _
  $region31: #{unet_innermost_forward.1} parent=0 // pred_check_branch
    %789 = sbr.rel (0) target = $region33
  $region32: #{unet_innermost_forward.1} parent=0 // pred_region
    _
  $region33: #{unet_innermost_forward.1} parent=0 // pred_fallthru
    _

</llo_original>
